<compile_context>
chip_gen: v5e
topology: v5e:2x2
jax: 0.10.0
libtpu: 0.0.40
codegen_flags: <defaults>
</compile_context>

<pallas_src>
import jax
import jax.numpy as jnp
from jax.experimental import pallas as pl
from jax.experimental.pallas import tpu as pltpu

HIDDEN = 32       # hidden_channels
IN_FEAT = 16      # input_features
OUT_FEAT = 4      # output_features
NUM_LAYERS = 2
GEN_EPS = 1e-7    # GENConv message eps
LN_EPS = 1e-5     # torch.nn.LayerNorm eps
LANES = 128       # TPU lane width

_VMEM = pl.BlockSpec(memory_space=pltpu.MemorySpace.VMEM)
_SMEM = pl.BlockSpec(memory_space=pltpu.MemorySpace.SMEM)


# ------------------------- static slab layouts (host + kernel) -------------------------

def _build_layouts():
    vec = {}
    r = [0]

    def add_v(name, w):
        vec[name] = (r[0], w)
        r[0] += 1

    add_v("enc_b", HIDDEN)
    add_v("mlp_b1", HIDDEN // 2)
    add_v("mlp_b2", OUT_FEAT)
    for i in range(NUM_LAYERS):
        add_v(f"norm_g_{i}", HIDDEN)
        add_v(f"norm_b_{i}", HIDDEN)
        add_v(f"b1_{i}", 2 * HIDDEN)
        add_v(f"ln_g_{i}", 2 * HIDDEN)
        add_v(f"ln_b_{i}", 2 * HIDDEN)
        add_v(f"b2_{i}", HIDDEN)
    vec_rows = -(-r[0] // 8) * 8

    mat = {}
    m = [0]

    def add_m(name, k, n):
        mat[name] = (m[0], k, n)
        m[0] += k          # all K's are multiples of 8 -> sublane-aligned offsets

    add_m("enc_w", IN_FEAT, HIDDEN)
    for i in range(NUM_LAYERS):
        add_m(f"w1_{i}", HIDDEN, 2 * HIDDEN)
        add_m(f"w2_{i}", 2 * HIDDEN, HIDDEN)
    add_m("mlp_w1", HIDDEN, HIDDEN // 2)
    add_m("mlp_w2", HIDDEN // 2, OUT_FEAT)
    mat_rows = -(-m[0] // 8) * 8
    return vec, vec_rows, mat, mat_rows


_VEC_LAYOUT, _VEC_ROWS, _MAT_LAYOUT, _MAT_ROWS = _build_layouts()


# --------------------------- in-kernel building blocks ---------------------------

def _linear(x, w, b, relu=False):
    # bf16 MXU operands (native fast path on v5e/v6e/v7x), f32 accumulate; bias/ReLU f32.
    y = jnp.dot(x.astype(jnp.bfloat16), w.astype(jnp.bfloat16),
                preferred_element_type=jnp.float32) + b
    return jnp.maximum(y, 0.0) if relu else y


def _layernorm(x, g, b, relu=False):
    # per-row LayerNorm over the feature (lane) axis, torch.nn.LayerNorm semantics.
    mean = jnp.mean(x, axis=-1, keepdims=True)
    var = jnp.mean((x - mean) ** 2, axis=-1, keepdims=True)
    y = (x - mean) * jax.lax.rsqrt(var + LN_EPS) * g + b
    return jnp.maximum(y, 0.0) if relu else y


def _gen_aggregate(x, adj, t):
    # GENConv (aggr='softmax') message + aggregation + root add (f32 throughout for
    # bit-closeness to the f32 PyTorch reference -- see perf review).
    #   message m_j = relu(x_j) + eps            (edge_attr is None)
    #   alpha[i,j,c] = exp(t*m[j,c]) / sum_{j' in N(i)} exp(t*m[j',c])
    #   out[i,c]     = sum_j alpha[i,j,c] * m[j,c]  ;  out = out + x
    h = x.shape[-1]
    m = jnp.maximum(x, 0.0) + GEN_EPS
    z = t * m
    # per-channel max shift: constant over source nodes -> cancels exactly in the ratio.
    z = z - jnp.max(z, axis=0, keepdims=True)
    e = jnp.exp(z)
    # merged RHS [e | e*m] -> a single MXU matmul for numerator and denominator.
    # (lane-concat is one vreg at H=32; switch to two dots / slab scratch at larger H)
    both = jnp.concatenate([e, e * m], axis=-1)                           # (N, 2H) f32
    agg = jnp.dot(adj, both, preferred_element_type=jnp.float32)          # (N, 2H)
    denom = agg[:, :h]
    numer = agg[:, h:]
    has_nbr = denom > 0.0
    safe = jnp.where(has_nbr, denom, 1.0)
    out = jnp.where(has_nbr, numer * pl.reciprocal(safe, approx=True), 0.0)
    return out + x


def _genconv(x, adj, t, w1, b1, lg, lb, w2, b2):
    # GENConv(H, H, aggr='softmax', t, num_layers=2, norm='layer'):
    #   softmax aggregation + root add, then MLP: Lin(H,2H) -> LayerNorm -> ReLU -> Lin(2H,H)
    h = _gen_aggregate(x, adj, t)
    h = _linear(h, w1, b1)
    h = _layernorm(h, lg, lb, relu=True)
    h = _linear(h, w2, b2)
    return h


# ------------------------------- fused kernel -------------------------------------

def _deeper_gcn_kernel(t_ref, x_ref, adj_ref, pool_ref, mat_ref, vec_ref, o_ref):
    # Slab unpacking: static pl.ds slices on the two parameter slabs (no extra DMAs).
    def W(name):
        off, k, n = _MAT_LAYOUT[name]
        return mat_ref[pl.ds(off, k), :n]

    def Wfull(name):        # full 128-lane (zero-padded) weight -> lane-dense output
        off, k, _ = _MAT_LAYOUT[name]
        return mat_ref[pl.ds(off, k), :]

    def V(name):
        row, n = _VEC_LAYOUT[name]
        return vec_ref[pl.ds(row, 1), :n]

    def Vfull(name):
        row, _ = _VEC_LAYOUT[name]
        return vec_ref[pl.ds(row, 1), :]

    adj = adj_ref[...]                                        # (N, N) f32, loaded once

    # node encoder
    x = _linear(x_ref[...], W("enc_w"), V("enc_b"))           # (N, H)

    # first layer: conv only (as in the reference forward)
    x = _genconv(x, adj, t_ref[0],
                 W("w1_0"), V("b1_0"), V("ln_g_0"), V("ln_b_0"), W("w2_0"), V("b2_0"))

    # remaining DeepGCNLayers, block='res+': x = x + conv(dropout(relu(norm(x))))
    for i in range(1, NUM_LAYERS):
        h = _layernorm(x, V(f"norm_g_{i}"), V(f"norm_b_{i}"), relu=True)
        # dropout(p=0.1) -> identity (inference)
        h = _genconv(h, adj, t_ref[i],
                     W(f"w1_{i}"), V(f"b1_{i}"), V(f"ln_g_{i}"), V(f"ln_b_{i}"),
                     W(f"w2_{i}"), V(f"b2_{i}"))
        x = x + h

    # final act(norm) of layer 0; F.dropout(p=0.1) -> identity (inference)
    x = _layernorm(x, V("norm_g_0"), V("norm_b_0"), relu=True)

    # global_add_pool(x, batch) as a dense pooling matmul (exact f32 sum)
    g = jnp.dot(pool_ref[...], x, preferred_element_type=jnp.float32)   # (G_pad, H)

    # output MLP: Lin(H, H/2) -> ReLU -> Lin(H/2, OUT)
    g = _linear(g, W("mlp_w1"), V("mlp_b1"), relu=True)
    # lane-dense final store: zero-padded (H/2,128) weight + (1,128) bias -> unmasked vst
    o_ref[...] = _linear(g, Wfull("mlp_w2"), Vfull("mlp_b2"))


# -------------------------------- host wrapper -------------------------------------

@jax.jit
def deeper_gcn_forward(params, x, adj, pool_mat):
    num_graphs = pool_mat.shape[0]
    g_pad = max(8, -(-num_graphs // 8) * 8)        # sublane-pad the pooled/output rows

    # softmax temperatures -> one small SMEM array read as scalars in-kernel
    t = jnp.concatenate([lp["conv"]["t"] for lp in params["layers"]]).astype(jnp.float32)

    # ---- pack all parameters into two contiguous f32 VMEM slabs ----
    vec = jnp.zeros((_VEC_ROWS, LANES), jnp.float32)
    mat = jnp.zeros((_MAT_ROWS, LANES), jnp.float32)

    def put_v(slab, name, arr):
        row, n = _VEC_LAYOUT[name]
        return slab.at[row, :n].set(arr.astype(jnp.float32))

    def put_m(slab, name, arr):
        off, k, n = _MAT_LAYOUT[name]
        return slab.at[off:off + k, :n].set(arr.astype(jnp.float32))

    vec = put_v(vec, "enc_b", params["enc_b"])
    vec = put_v(vec, "mlp_b1", params["mlp_b1"])
    vec = put_v(vec, "mlp_b2", params["mlp_b2"])
    mat = put_m(mat, "enc_w", params["enc_w"])
    mat = put_m(mat, "mlp_w1", params["mlp_w1"])
    mat = put_m(mat, "mlp_w2", params["mlp_w2"])
    for i, lp in enumerate(params["layers"]):
        c = lp["conv"]
        vec = put_v(vec, f"norm_g_{i}", lp["norm_g"])
        vec = put_v(vec, f"norm_b_{i}", lp["norm_b"])
        vec = put_v(vec, f"b1_{i}", c["b1"])
        vec = put_v(vec, f"ln_g_{i}", c["ln_g"])
        vec = put_v(vec, f"ln_b_{i}", c["ln_b"])
        vec = put_v(vec, f"b2_{i}", c["b2"])
        mat = put_m(mat, f"w1_{i}", c["w1"])
        mat = put_m(mat, f"w2_{i}", c["w2"])

    pool_pad = jnp.zeros((g_pad, pool_mat.shape[1]), jnp.float32)
    pool_pad = pool_pad.at[:num_graphs].set(pool_mat.astype(jnp.float32))

    out = pl.pallas_call(
        _deeper_gcn_kernel,
        out_shape=jax.ShapeDtypeStruct((g_pad, LANES), jnp.float32),
        in_specs=[_SMEM] + [_VMEM] * 5,
        out_specs=_VMEM,
    )(t, x.astype(jnp.float32), adj.astype(jnp.float32), pool_pad, mat, vec)

    return out[:num_graphs, :OUT_FEAT]


# ------------------------------- parameter init ------------------------------------

def init_params(key):
    keys = jax.random.split(key, 16)
    ki = iter(keys)

    def w(shape):
        return (0.1 * jax.random.normal(next(ki), shape)).astype(jnp.float32)

    params = {
        "enc_w": w((IN_FEAT, HIDDEN)),
        "enc_b": w((HIDDEN,)),
        "mlp_w1": w((HIDDEN, HIDDEN // 2)),
        "mlp_b1": w((HIDDEN // 2,)),
        "mlp_w2": w((HIDDEN // 2, OUT_FEAT)),
        "mlp_b2": w((OUT_FEAT,)),
        "layers": [],
    }
    for _ in range(NUM_LAYERS):
        params["layers"].append({
            "norm_g": jnp.ones((HIDDEN,), jnp.float32),
            "norm_b": jnp.zeros((HIDDEN,), jnp.float32),
            "conv": {
                "t": jnp.ones((1,), jnp.float32),            # learn_t=True, init t=1.0
                "w1": w((HIDDEN, 2 * HIDDEN)),
                "b1": w((2 * HIDDEN,)),
                "ln_g": jnp.ones((2 * HIDDEN,), jnp.float32),
                "ln_b": jnp.zeros((2 * HIDDEN,), jnp.float32),
                "w2": w((2 * HIDDEN, HIDDEN)),
                "b2": w((HIDDEN,)),
            },
        })
    return params


# ------------------------------------ main ------------------------------------------

if __name__ == "__main__":
    key = jax.random.PRNGKey(0)
    kp, kx = jax.random.split(key)
    params = init_params(kp)

    N = 8          # nodes
    NUM_GRAPHS = 2

    x = jax.random.normal(kx, (N, IN_FEAT), dtype=jnp.float32)

    # edge_index (2, E): row 0 = source nodes j, row 1 = target nodes i
    src = jnp.array([0, 1, 1, 2, 2, 3, 3, 4, 0, 5, 6, 6, 7], jnp.int32)
    dst = jnp.array([1, 0, 2, 1, 3, 2, 4, 3, 4, 6, 5, 7, 6], jnp.int32)
    edge_index = jnp.stack([src, dst])

    batch = jnp.array([0, 0, 0, 0, 0, 1, 1, 1], jnp.int32)

    # Dense adjacency: adj[i, j] = #edges j -> i (messages aggregate at destination i).
    adj = jnp.zeros((N, N), jnp.float32).at[edge_index[1], edge_index[0]].add(1.0)
    # Pool matrix for global_add_pool: pool[g, n] = 1 if node n belongs to graph g.
    pool_mat = (batch[None, :] == jnp.arange(NUM_GRAPHS)[:, None]).astype(jnp.float32)

    out = deeper_gcn_forward(params, x, adj, pool_mat)
    out = jax.block_until_ready(out)
    assert out.shape == (NUM_GRAPHS, OUT_FEAT)
    assert bool(jnp.all(jnp.isfinite(out)))
    print("KERNEL_OK")
</pallas_src>

<mosaic_0001>
module attributes {stable_mosaic.version = 11 : i64} {
  func.func @_deeper_gcn_kernel(%arg0: memref<2xf32, #tpu.memory_space<smem>>, %arg1: memref<8x16xf32, #tpu.memory_space<vmem>>, %arg2: memref<8x8xf32, #tpu.memory_space<vmem>>, %arg3: memref<8x8xf32, #tpu.memory_space<vmem>>, %arg4: memref<256x128xf32, #tpu.memory_space<vmem>>, %arg5: memref<16x128xf32, #tpu.memory_space<vmem>>, %arg6: memref<8x128xf32, #tpu.memory_space<vmem>>) attributes {dimension_semantics = [], scalar_prefetch = 0 : i64, scratch_operands = 0 : i64, tpu.core_type = #tpu.core_type<tc>} {
    %c0 = arith.constant 0 : index
    %c0_0 = arith.constant 0 : index
    %0 = vector.load %arg2[%c0, %c0_0] : memref<8x8xf32, #tpu.memory_space<vmem>>, vector<8x8xf32>
    %c0_1 = arith.constant 0 : index
    %c0_2 = arith.constant 0 : index
    %1 = vector.load %arg1[%c0_1, %c0_2] : memref<8x16xf32, #tpu.memory_space<vmem>>, vector<8x16xf32>
    %c0_3 = arith.constant 0 : index
    %c0_4 = arith.constant 0 : index
    %2 = vector.load %arg4[%c0_3, %c0_4] : memref<256x128xf32, #tpu.memory_space<vmem>>, vector<16x32xf32>
    %c0_5 = arith.constant 0 : index
    %c0_6 = arith.constant 0 : index
    %3 = vector.load %arg5[%c0_5, %c0_6] : memref<16x128xf32, #tpu.memory_space<vmem>>, vector<1x32xf32>
    %4 = arith.truncf %1 : vector<8x16xf32> to vector<8x16xbf16>
    %5 = arith.truncf %2 : vector<16x32xf32> to vector<16x32xbf16>
    %cst = arith.constant dense<0.000000e+00> : vector<8x32xf32>
    %6 = tpu.matmul %4, %5, %cst {dimension_numbers = #tpu.dot_dimension_numbers<[1], [0], [0], [1], [0, 0, 1, 1], [], []>} : vector<8x16xbf16>, vector<16x32xbf16>, vector<8x32xf32> -> vector<8x32xf32>
    %7 = vector.broadcast %3 : vector<1x32xf32> to vector<8x32xf32>
    %8 = arith.addf %6, %7 : vector<8x32xf32>
    %c0_7 = arith.constant 0 : index
    %9 = memref.load %arg0[%c0_7] : memref<2xf32, #tpu.memory_space<smem>>
    %c16 = arith.constant 16 : index
    %c0_8 = arith.constant 0 : index
    %10 = vector.load %arg4[%c16, %c0_8] : memref<256x128xf32, #tpu.memory_space<vmem>>, vector<32x64xf32>
    %c5 = arith.constant 5 : index
    %c0_9 = arith.constant 0 : index
    %11 = vector.load %arg5[%c5, %c0_9] : memref<16x128xf32, #tpu.memory_space<vmem>>, vector<1x64xf32>
    %c6 = arith.constant 6 : index
    %c0_10 = arith.constant 0 : index
    %12 = vector.load %arg5[%c6, %c0_10] : memref<16x128xf32, #tpu.memory_space<vmem>>, vector<1x64xf32>
    %c7 = arith.constant 7 : index
    %c0_11 = arith.constant 0 : index
    %13 = vector.load %arg5[%c7, %c0_11] : memref<16x128xf32, #tpu.memory_space<vmem>>, vector<1x64xf32>
    %c48 = arith.constant 48 : index
    %c0_12 = arith.constant 0 : index
    %14 = vector.load %arg4[%c48, %c0_12] : memref<256x128xf32, #tpu.memory_space<vmem>>, vector<64x32xf32>
    %c8 = arith.constant 8 : index
    %c0_13 = arith.constant 0 : index
    %15 = vector.load %arg5[%c8, %c0_13] : memref<16x128xf32, #tpu.memory_space<vmem>>, vector<1x32xf32>
    %cst_14 = arith.constant 0.000000e+00 : f32
    %16 = vector.broadcast %cst_14 : f32 to vector<8x32xf32>
    %17 = arith.maximumf %8, %16 : vector<8x32xf32>
    %cst_15 = arith.constant 1.000000e-07 : f32
    %18 = vector.broadcast %cst_15 : f32 to vector<8x32xf32>
    %19 = arith.addf %17, %18 : vector<8x32xf32>
    %20 = vector.broadcast %9 : f32 to vector<8x32xf32>
    %21 = arith.mulf %20, %19 : vector<8x32xf32>
    %cst_16 = arith.constant dense<0xFF800000> : vector<32xf32>
    %22 = vector.multi_reduction <maximumf>, %21, %cst_16 [0] : vector<8x32xf32> to vector<32xf32>
    %23 = vector.shape_cast %22 : vector<32xf32> to vector<1x32xf32>
    %24 = vector.broadcast %23 : vector<1x32xf32> to vector<8x32xf32>
    %25 = arith.subf %21, %24 : vector<8x32xf32>
    %26 = math.exp %25 : vector<8x32xf32>
    %27 = arith.mulf %26, %19 : vector<8x32xf32>
    %28 = tpu.concatenate %26, %27 in 1 : vector<8x32xf32>, vector<8x32xf32> -> vector<8x64xf32>
    %cst_17 = arith.constant dense<0.000000e+00> : vector<8x64xf32>
    %29 = tpu.matmul %0, %28, %cst_17 {dimension_numbers = #tpu.dot_dimension_numbers<[1], [0], [0], [1], [0, 0, 1, 1], [], []>} : vector<8x8xf32>, vector<8x64xf32>, vector<8x64xf32> -> vector<8x64xf32>
    %30 = vector.extract_strided_slice %29 {offsets = [0, 0], sizes = [8, 32], strides = [1, 1]} : vector<8x64xf32> to vector<8x32xf32>
    %31 = vector.extract_strided_slice %29 {offsets = [0, 32], sizes = [8, 32], strides = [1, 1]} : vector<8x64xf32> to vector<8x32xf32>
    %cst_18 = arith.constant 0.000000e+00 : f32
    %32 = vector.broadcast %cst_18 : f32 to vector<8x32xf32>
    %33 = arith.cmpf ogt, %30, %32 : vector<8x32xf32>
    %cst_19 = arith.constant 1.000000e+00 : f32
    %34 = vector.broadcast %cst_19 : f32 to vector<8x32xf32>
    %35 = arith.select %33, %30, %34 : vector<8x32xi1>, vector<8x32xf32>
    %36 = tpu.reciprocal %35 {approx = true} : vector<8x32xf32> -> vector<8x32xf32>
    %37 = arith.mulf %31, %36 : vector<8x32xf32>
    %cst_20 = arith.constant 0.000000e+00 : f32
    %38 = vector.broadcast %cst_20 : f32 to vector<8x32xf32>
    %39 = arith.select %33, %37, %38 : vector<8x32xi1>, vector<8x32xf32>
    %40 = arith.addf %39, %8 : vector<8x32xf32>
    %41 = arith.truncf %40 : vector<8x32xf32> to vector<8x32xbf16>
    %42 = arith.truncf %10 : vector<32x64xf32> to vector<32x64xbf16>
    %cst_21 = arith.constant dense<0.000000e+00> : vector<8x64xf32>
    %43 = tpu.matmul %41, %42, %cst_21 {dimension_numbers = #tpu.dot_dimension_numbers<[1], [0], [0], [1], [0, 0, 1, 1], [], []>} : vector<8x32xbf16>, vector<32x64xbf16>, vector<8x64xf32> -> vector<8x64xf32>
    %44 = vector.broadcast %11 : vector<1x64xf32> to vector<8x64xf32>
    %45 = arith.addf %43, %44 : vector<8x64xf32>
    %cst_22 = arith.constant dense<0.000000e+00> : vector<8xf32>
    %46 = vector.multi_reduction <add>, %45, %cst_22 [1] : vector<8x64xf32> to vector<8xf32>
    %47 = vector.shape_cast %46 : vector<8xf32> to vector<8x1xf32>
    %cst_23 = arith.constant 6.400000e+01 : f32
    %48 = vector.broadcast %cst_23 : f32 to vector<8x1xf32>
    %49 = arith.divf %47, %48 : vector<8x1xf32>
    %50 = vector.broadcast %49 : vector<8x1xf32> to vector<8x64xf32>
    %51 = arith.subf %45, %50 : vector<8x64xf32>
    %52 = arith.mulf %51, %51 : vector<8x64xf32>
    %cst_24 = arith.constant dense<0.000000e+00> : vector<8xf32>
    %53 = vector.multi_reduction <add>, %52, %cst_24 [1] : vector<8x64xf32> to vector<8xf32>
    %54 = vector.shape_cast %53 : vector<8xf32> to vector<8x1xf32>
    %cst_25 = arith.constant 6.400000e+01 : f32
    %55 = vector.broadcast %cst_25 : f32 to vector<8x1xf32>
    %56 = arith.divf %54, %55 : vector<8x1xf32>
    %57 = vector.broadcast %49 : vector<8x1xf32> to vector<8x64xf32>
    %58 = arith.subf %45, %57 : vector<8x64xf32>
    %cst_26 = arith.constant 9.99999974E-6 : f32
    %59 = vector.broadcast %cst_26 : f32 to vector<8x1xf32>
    %60 = arith.addf %56, %59 : vector<8x1xf32>
    %61 = math.rsqrt %60 : vector<8x1xf32>
    %62 = vector.broadcast %61 : vector<8x1xf32> to vector<8x64xf32>
    %63 = arith.mulf %58, %62 : vector<8x64xf32>
    %64 = vector.broadcast %12 : vector<1x64xf32> to vector<8x64xf32>
    %65 = arith.mulf %63, %64 : vector<8x64xf32>
    %66 = vector.broadcast %13 : vector<1x64xf32> to vector<8x64xf32>
    %67 = arith.addf %65, %66 : vector<8x64xf32>
    %cst_27 = arith.constant 0.000000e+00 : f32
    %68 = vector.broadcast %cst_27 : f32 to vector<8x64xf32>
    %69 = arith.maximumf %67, %68 : vector<8x64xf32>
    %70 = arith.truncf %69 : vector<8x64xf32> to vector<8x64xbf16>
    %71 = arith.truncf %14 : vector<64x32xf32> to vector<64x32xbf16>
    %cst_28 = arith.constant dense<0.000000e+00> : vector<8x32xf32>
    %72 = tpu.matmul %70, %71, %cst_28 {dimension_numbers = #tpu.dot_dimension_numbers<[1], [0], [0], [1], [0, 0, 1, 1], [], []>} : vector<8x64xbf16>, vector<64x32xbf16>, vector<8x32xf32> -> vector<8x32xf32>
    %73 = vector.broadcast %15 : vector<1x32xf32> to vector<8x32xf32>
    %74 = arith.addf %72, %73 : vector<8x32xf32>
    %c9 = arith.constant 9 : index
    %c0_29 = arith.constant 0 : index
    %75 = vector.load %arg5[%c9, %c0_29] : memref<16x128xf32, #tpu.memory_space<vmem>>, vector<1x32xf32>
    %c10 = arith.constant 10 : index
    %c0_30 = arith.constant 0 : index
    %76 = vector.load %arg5[%c10, %c0_30] : memref<16x128xf32, #tpu.memory_space<vmem>>, vector<1x32xf32>
    %cst_31 = arith.constant dense<0.000000e+00> : vector<8xf32>
    %77 = vector.multi_reduction <add>, %74, %cst_31 [1] : vector<8x32xf32> to vector<8xf32>
    %78 = vector.shape_cast %77 : vector<8xf32> to vector<8x1xf32>
    %cst_32 = arith.constant 3.200000e+01 : f32
    %79 = vector.broadcast %cst_32 : f32 to vector<8x1xf32>
    %80 = arith.divf %78, %79 : vector<8x1xf32>
    %81 = vector.broadcast %80 : vector<8x1xf32> to vector<8x32xf32>
    %82 = arith.subf %74, %81 : vector<8x32xf32>
    %83 = arith.mulf %82, %82 : vector<8x32xf32>
    %cst_33 = arith.constant dense<0.000000e+00> : vector<8xf32>
    %84 = vector.multi_reduction <add>, %83, %cst_33 [1] : vector<8x32xf32> to vector<8xf32>
    %85 = vector.shape_cast %84 : vector<8xf32> to vector<8x1xf32>
    %cst_34 = arith.constant 3.200000e+01 : f32
    %86 = vector.broadcast %cst_34 : f32 to vector<8x1xf32>
    %87 = arith.divf %85, %86 : vector<8x1xf32>
    %88 = vector.broadcast %80 : vector<8x1xf32> to vector<8x32xf32>
    %89 = arith.subf %74, %88 : vector<8x32xf32>
    %cst_35 = arith.constant 9.99999974E-6 : f32
    %90 = vector.broadcast %cst_35 : f32 to vector<8x1xf32>
    %91 = arith.addf %87, %90 : vector<8x1xf32>
    %92 = math.rsqrt %91 : vector<8x1xf32>
    %93 = vector.broadcast %92 : vector<8x1xf32> to vector<8x32xf32>
    %94 = arith.mulf %89, %93 : vector<8x32xf32>
    %95 = vector.broadcast %75 : vector<1x32xf32> to vector<8x32xf32>
    %96 = arith.mulf %94, %95 : vector<8x32xf32>
    %97 = vector.broadcast %76 : vector<1x32xf32> to vector<8x32xf32>
    %98 = arith.addf %96, %97 : vector<8x32xf32>
    %cst_36 = arith.constant 0.000000e+00 : f32
    %99 = vector.broadcast %cst_36 : f32 to vector<8x32xf32>
    %100 = arith.maximumf %98, %99 : vector<8x32xf32>
    %c1 = arith.constant 1 : index
    %101 = memref.load %arg0[%c1] : memref<2xf32, #tpu.memory_space<smem>>
    %c112 = arith.constant 112 : index
    %c0_37 = arith.constant 0 : index
    %102 = vector.load %arg4[%c112, %c0_37] : memref<256x128xf32, #tpu.memory_space<vmem>>, vector<32x64xf32>
    %c11 = arith.constant 11 : index
    %c0_38 = arith.constant 0 : index
    %103 = vector.load %arg5[%c11, %c0_38] : memref<16x128xf32, #tpu.memory_space<vmem>>, vector<1x64xf32>
    %c12 = arith.constant 12 : index
    %c0_39 = arith.constant 0 : index
    %104 = vector.load %arg5[%c12, %c0_39] : memref<16x128xf32, #tpu.memory_space<vmem>>, vector<1x64xf32>
    %c13 = arith.constant 13 : index
    %c0_40 = arith.constant 0 : index
    %105 = vector.load %arg5[%c13, %c0_40] : memref<16x128xf32, #tpu.memory_space<vmem>>, vector<1x64xf32>
    %c144 = arith.constant 144 : index
    %c0_41 = arith.constant 0 : index
    %106 = vector.load %arg4[%c144, %c0_41] : memref<256x128xf32, #tpu.memory_space<vmem>>, vector<64x32xf32>
    %c14 = arith.constant 14 : index
    %c0_42 = arith.constant 0 : index
    %107 = vector.load %arg5[%c14, %c0_42] : memref<16x128xf32, #tpu.memory_space<vmem>>, vector<1x32xf32>
    %cst_43 = arith.constant 0.000000e+00 : f32
    %108 = vector.broadcast %cst_43 : f32 to vector<8x32xf32>
    %109 = arith.maximumf %100, %108 : vector<8x32xf32>
    %cst_44 = arith.constant 1.000000e-07 : f32
    %110 = vector.broadcast %cst_44 : f32 to vector<8x32xf32>
    %111 = arith.addf %109, %110 : vector<8x32xf32>
    %112 = vector.broadcast %101 : f32 to vector<8x32xf32>
    %113 = arith.mulf %112, %111 : vector<8x32xf32>
    %cst_45 = arith.constant dense<0xFF800000> : vector<32xf32>
    %114 = vector.multi_reduction <maximumf>, %113, %cst_45 [0] : vector<8x32xf32> to vector<32xf32>
    %115 = vector.shape_cast %114 : vector<32xf32> to vector<1x32xf32>
    %116 = vector.broadcast %115 : vector<1x32xf32> to vector<8x32xf32>
    %117 = arith.subf %113, %116 : vector<8x32xf32>
    %118 = math.exp %117 : vector<8x32xf32>
    %119 = arith.mulf %118, %111 : vector<8x32xf32>
    %120 = tpu.concatenate %118, %119 in 1 : vector<8x32xf32>, vector<8x32xf32> -> vector<8x64xf32>
    %cst_46 = arith.constant dense<0.000000e+00> : vector<8x64xf32>
    %121 = tpu.matmul %0, %120, %cst_46 {dimension_numbers = #tpu.dot_dimension_numbers<[1], [0], [0], [1], [0, 0, 1, 1], [], []>} : vector<8x8xf32>, vector<8x64xf32>, vector<8x64xf32> -> vector<8x64xf32>
    %122 = vector.extract_strided_slice %121 {offsets = [0, 0], sizes = [8, 32], strides = [1, 1]} : vector<8x64xf32> to vector<8x32xf32>
    %123 = vector.extract_strided_slice %121 {offsets = [0, 32], sizes = [8, 32], strides = [1, 1]} : vector<8x64xf32> to vector<8x32xf32>
    %cst_47 = arith.constant 0.000000e+00 : f32
    %124 = vector.broadcast %cst_47 : f32 to vector<8x32xf32>
    %125 = arith.cmpf ogt, %122, %124 : vector<8x32xf32>
    %cst_48 = arith.constant 1.000000e+00 : f32
    %126 = vector.broadcast %cst_48 : f32 to vector<8x32xf32>
    %127 = arith.select %125, %122, %126 : vector<8x32xi1>, vector<8x32xf32>
    %128 = tpu.reciprocal %127 {approx = true} : vector<8x32xf32> -> vector<8x32xf32>
    %129 = arith.mulf %123, %128 : vector<8x32xf32>
    %cst_49 = arith.constant 0.000000e+00 : f32
    %130 = vector.broadcast %cst_49 : f32 to vector<8x32xf32>
    %131 = arith.select %125, %129, %130 : vector<8x32xi1>, vector<8x32xf32>
    %132 = arith.addf %131, %100 : vector<8x32xf32>
    %133 = arith.truncf %132 : vector<8x32xf32> to vector<8x32xbf16>
    %134 = arith.truncf %102 : vector<32x64xf32> to vector<32x64xbf16>
    %cst_50 = arith.constant dense<0.000000e+00> : vector<8x64xf32>
    %135 = tpu.matmul %133, %134, %cst_50 {dimension_numbers = #tpu.dot_dimension_numbers<[1], [0], [0], [1], [0, 0, 1, 1], [], []>} : vector<8x32xbf16>, vector<32x64xbf16>, vector<8x64xf32> -> vector<8x64xf32>
    %136 = vector.broadcast %103 : vector<1x64xf32> to vector<8x64xf32>
    %137 = arith.addf %135, %136 : vector<8x64xf32>
    %cst_51 = arith.constant dense<0.000000e+00> : vector<8xf32>
    %138 = vector.multi_reduction <add>, %137, %cst_51 [1] : vector<8x64xf32> to vector<8xf32>
    %139 = vector.shape_cast %138 : vector<8xf32> to vector<8x1xf32>
    %cst_52 = arith.constant 6.400000e+01 : f32
    %140 = vector.broadcast %cst_52 : f32 to vector<8x1xf32>
    %141 = arith.divf %139, %140 : vector<8x1xf32>
    %142 = vector.broadcast %141 : vector<8x1xf32> to vector<8x64xf32>
    %143 = arith.subf %137, %142 : vector<8x64xf32>
    %144 = arith.mulf %143, %143 : vector<8x64xf32>
    %cst_53 = arith.constant dense<0.000000e+00> : vector<8xf32>
    %145 = vector.multi_reduction <add>, %144, %cst_53 [1] : vector<8x64xf32> to vector<8xf32>
    %146 = vector.shape_cast %145 : vector<8xf32> to vector<8x1xf32>
    %cst_54 = arith.constant 6.400000e+01 : f32
    %147 = vector.broadcast %cst_54 : f32 to vector<8x1xf32>
    %148 = arith.divf %146, %147 : vector<8x1xf32>
    %149 = vector.broadcast %141 : vector<8x1xf32> to vector<8x64xf32>
    %150 = arith.subf %137, %149 : vector<8x64xf32>
    %cst_55 = arith.constant 9.99999974E-6 : f32
    %151 = vector.broadcast %cst_55 : f32 to vector<8x1xf32>
    %152 = arith.addf %148, %151 : vector<8x1xf32>
    %153 = math.rsqrt %152 : vector<8x1xf32>
    %154 = vector.broadcast %153 : vector<8x1xf32> to vector<8x64xf32>
    %155 = arith.mulf %150, %154 : vector<8x64xf32>
    %156 = vector.broadcast %104 : vector<1x64xf32> to vector<8x64xf32>
    %157 = arith.mulf %155, %156 : vector<8x64xf32>
    %158 = vector.broadcast %105 : vector<1x64xf32> to vector<8x64xf32>
    %159 = arith.addf %157, %158 : vector<8x64xf32>
    %cst_56 = arith.constant 0.000000e+00 : f32
    %160 = vector.broadcast %cst_56 : f32 to vector<8x64xf32>
    %161 = arith.maximumf %159, %160 : vector<8x64xf32>
    %162 = arith.truncf %161 : vector<8x64xf32> to vector<8x64xbf16>
    %163 = arith.truncf %106 : vector<64x32xf32> to vector<64x32xbf16>
    %cst_57 = arith.constant dense<0.000000e+00> : vector<8x32xf32>
    %164 = tpu.matmul %162, %163, %cst_57 {dimension_numbers = #tpu.dot_dimension_numbers<[1], [0], [0], [1], [0, 0, 1, 1], [], []>} : vector<8x64xbf16>, vector<64x32xbf16>, vector<8x32xf32> -> vector<8x32xf32>
    %165 = vector.broadcast %107 : vector<1x32xf32> to vector<8x32xf32>
    %166 = arith.addf %164, %165 : vector<8x32xf32>
    %167 = arith.addf %74, %166 : vector<8x32xf32>
    %c3 = arith.constant 3 : index
    %c0_58 = arith.constant 0 : index
    %168 = vector.load %arg5[%c3, %c0_58] : memref<16x128xf32, #tpu.memory_space<vmem>>, vector<1x32xf32>
    %c4 = arith.constant 4 : index
    %c0_59 = arith.constant 0 : index
    %169 = vector.load %arg5[%c4, %c0_59] : memref<16x128xf32, #tpu.memory_space<vmem>>, vector<1x32xf32>
    %cst_60 = arith.constant dense<0.000000e+00> : vector<8xf32>
    %170 = vector.multi_reduction <add>, %167, %cst_60 [1] : vector<8x32xf32> to vector<8xf32>
    %171 = vector.shape_cast %170 : vector<8xf32> to vector<8x1xf32>
    %cst_61 = arith.constant 3.200000e+01 : f32
    %172 = vector.broadcast %cst_61 : f32 to vector<8x1xf32>
    %173 = arith.divf %171, %172 : vector<8x1xf32>
    %174 = vector.broadcast %173 : vector<8x1xf32> to vector<8x32xf32>
    %175 = arith.subf %167, %174 : vector<8x32xf32>
    %176 = arith.mulf %175, %175 : vector<8x32xf32>
    %cst_62 = arith.constant dense<0.000000e+00> : vector<8xf32>
    %177 = vector.multi_reduction <add>, %176, %cst_62 [1] : vector<8x32xf32> to vector<8xf32>
    %178 = vector.shape_cast %177 : vector<8xf32> to vector<8x1xf32>
    %cst_63 = arith.constant 3.200000e+01 : f32
    %179 = vector.broadcast %cst_63 : f32 to vector<8x1xf32>
    %180 = arith.divf %178, %179 : vector<8x1xf32>
    %181 = vector.broadcast %173 : vector<8x1xf32> to vector<8x32xf32>
    %182 = arith.subf %167, %181 : vector<8x32xf32>
    %cst_64 = arith.constant 9.99999974E-6 : f32
    %183 = vector.broadcast %cst_64 : f32 to vector<8x1xf32>
    %184 = arith.addf %180, %183 : vector<8x1xf32>
    %185 = math.rsqrt %184 : vector<8x1xf32>
    %186 = vector.broadcast %185 : vector<8x1xf32> to vector<8x32xf32>
    %187 = arith.mulf %182, %186 : vector<8x32xf32>
    %188 = vector.broadcast %168 : vector<1x32xf32> to vector<8x32xf32>
    %189 = arith.mulf %187, %188 : vector<8x32xf32>
    %190 = vector.broadcast %169 : vector<1x32xf32> to vector<8x32xf32>
    %191 = arith.addf %189, %190 : vector<8x32xf32>
    %cst_65 = arith.constant 0.000000e+00 : f32
    %192 = vector.broadcast %cst_65 : f32 to vector<8x32xf32>
    %193 = arith.maximumf %191, %192 : vector<8x32xf32>
    %c0_66 = arith.constant 0 : index
    %c0_67 = arith.constant 0 : index
    %194 = vector.load %arg3[%c0_66, %c0_67] : memref<8x8xf32, #tpu.memory_space<vmem>>, vector<8x8xf32>
    %cst_68 = arith.constant dense<0.000000e+00> : vector<8x32xf32>
    %195 = tpu.matmul %194, %193, %cst_68 {dimension_numbers = #tpu.dot_dimension_numbers<[1], [0], [0], [1], [0, 0, 1, 1], [], []>} : vector<8x8xf32>, vector<8x32xf32>, vector<8x32xf32> -> vector<8x32xf32>
    %c208 = arith.constant 208 : index
    %c0_69 = arith.constant 0 : index
    %196 = vector.load %arg4[%c208, %c0_69] : memref<256x128xf32, #tpu.memory_space<vmem>>, vector<32x16xf32>
    %c1_70 = arith.constant 1 : index
    %c0_71 = arith.constant 0 : index
    %197 = vector.load %arg5[%c1_70, %c0_71] : memref<16x128xf32, #tpu.memory_space<vmem>>, vector<1x16xf32>
    %198 = arith.truncf %195 : vector<8x32xf32> to vector<8x32xbf16>
    %199 = arith.truncf %196 : vector<32x16xf32> to vector<32x16xbf16>
    %cst_72 = arith.constant dense<0.000000e+00> : vector<8x16xf32>
    %200 = tpu.matmul %198, %199, %cst_72 {dimension_numbers = #tpu.dot_dimension_numbers<[1], [0], [0], [1], [0, 0, 1, 1], [], []>} : vector<8x32xbf16>, vector<32x16xbf16>, vector<8x16xf32> -> vector<8x16xf32>
    %201 = vector.broadcast %197 : vector<1x16xf32> to vector<8x16xf32>
    %202 = arith.addf %200, %201 : vector<8x16xf32>
    %cst_73 = arith.constant 0.000000e+00 : f32
    %203 = vector.broadcast %cst_73 : f32 to vector<8x16xf32>
    %204 = arith.maximumf %202, %203 : vector<8x16xf32>
    %c240 = arith.constant 240 : index
    %c0_74 = arith.constant 0 : index
    %205 = vector.load %arg4[%c240, %c0_74] : memref<256x128xf32, #tpu.memory_space<vmem>>, vector<16x128xf32>
    %c2 = arith.constant 2 : index
    %c0_75 = arith.constant 0 : index
    %206 = vector.load %arg5[%c2, %c0_75] : memref<16x128xf32, #tpu.memory_space<vmem>>, vector<1x128xf32>
    %207 = arith.truncf %204 : vector<8x16xf32> to vector<8x16xbf16>
    %208 = arith.truncf %205 : vector<16x128xf32> to vector<16x128xbf16>
    %cst_76 = arith.constant dense<0.000000e+00> : vector<8x128xf32>
    %209 = tpu.matmul %207, %208, %cst_76 {dimension_numbers = #tpu.dot_dimension_numbers<[1], [0], [0], [1], [0, 0, 1, 1], [], []>} : vector<8x16xbf16>, vector<16x128xbf16>, vector<8x128xf32> -> vector<8x128xf32>
    %210 = vector.broadcast %206 : vector<1x128xf32> to vector<8x128xf32>
    %211 = arith.addf %209, %210 : vector<8x128xf32>
    %c0_77 = arith.constant 0 : index
    %c0_78 = arith.constant 0 : index
    %212 = vector.load %arg6[%c0_77, %c0_78] : memref<8x128xf32, #tpu.memory_space<vmem>>, vector<8x128xf32>
    tpu.vector_store %arg6[%c0_77, %c0_78], %211 {strides = array<i32>} : memref<8x128xf32, #tpu.memory_space<vmem>>, vector<8x128xf32>,
    return
  }
}

</mosaic_0001>

<llo_original>
// kernel: deeper_gcn_forward.1
$region0: #{deeper_gcn_forward.1}
  #allocation0 [shape = 'u32[]', space=smem, size = 0x4, offset = 0x4, fixed_abs, tag = 'smem constant byte address 0x4 - core index']
  #allocation1 [shape = 'u32[72,128]{1,0:T(1,128)}', space=vmem, size = 0x9000, scoped, tag = 'internal scratch']
  %s0 = inlined_call_operand.vmem [shape: f32[2], index: 0, kind: input, shape index: {}]
  %s1 = inlined_call_operand.vmem [shape: f32[8,16], index: 1, kind: input, shape index: {}]
  %s2 = inlined_call_operand.vmem [shape: f32[8,8], index: 2, kind: input, shape index: {}]
  %s3 = inlined_call_operand.vmem [shape: f32[8,8], index: 3, kind: input, shape index: {}]
  %s4 = inlined_call_operand.vmem [shape: f32[256,128], index: 4, kind: input, shape index: {}]
  %s5 = inlined_call_operand.vmem [shape: f32[16,128], index: 5, kind: input, shape index: {}]
  %s6 = inlined_call_operand.vmem [shape: f32[8,128], index: 6, kind: output, shape index: {}]
  %s7 = sld [smem:[#allocation0]]
  $region38: #{deeper_gcn_forward.1} parent=0
    _
  %s9 = ssub.s32 1, %s7
  %s10 = scalar_select 0, %s9, %s7
  $region1: #{deeper_gcn_forward.1} parent=0
    #allocation2 [shape = 'u8[512]{0}', space=smem, size = 0x200, scoped, tag = 'input window, operand 0, single buffered']
    #allocation3 [shape = 's32[1]{0}', space=sflag, size = 0x4, scoped, tag = 'scoped memory for deeper_gcn_forward.1']
    %11 = vsyncpa [#allocation3], 0
    // Predicated region
    $region2: #{deeper_gcn_forward.1} parent=1 // pred_check
      _
    $region3: #{deeper_gcn_forward.1} parent=1 // pred_check_branch
      %13 = sbr.rel (0) target = $region5
    $region4: #{deeper_gcn_forward.1} parent=1 // pred_region
      %15 = vsyncadd [#allocation3], 0
      %s17 = sshll.u32 %s0, 4
      %s18 = int_to_ptr.vmem [resolvable:$true] %s17
      %20 = dma.vmem_to_smem %s18, 16, [#allocation2], [#allocation3]
    $region5: #{deeper_gcn_forward.1} parent=1 // pred_fallthru
      _
    // Predicated region
    $region6: #{deeper_gcn_forward.1} parent=1 // pred_check
      _
    $region7: #{deeper_gcn_forward.1} parent=1 // pred_check_branch
      %22 = sbr.rel (0) target = $region9
    $region8: #{deeper_gcn_forward.1} parent=1 // pred_region
      _
    $region9: #{deeper_gcn_forward.1} parent=1 // pred_fallthru
      _
    // Predicated region
    $region10: #{deeper_gcn_forward.1} parent=1 // pred_check
      _
    $region11: #{deeper_gcn_forward.1} parent=1 // pred_check_branch
      %24 = sbr.rel (0) target = $region13
    $region12: #{deeper_gcn_forward.1} parent=1 // pred_region
      _
    $region13: #{deeper_gcn_forward.1} parent=1 // pred_fallthru
      _
    // Predicated region
    $region14: #{deeper_gcn_forward.1} parent=1 // pred_check
      _
    $region15: #{deeper_gcn_forward.1} parent=1 // pred_check_branch
      %26 = sbr.rel (0) target = $region17
    $region16: #{deeper_gcn_forward.1} parent=1 // pred_region
      _
    $region17: #{deeper_gcn_forward.1} parent=1 // pred_fallthru
      _
    // Predicated region
    $region18: #{deeper_gcn_forward.1} parent=1 // pred_check
      _
    $region19: #{deeper_gcn_forward.1} parent=1 // pred_check_branch
      %28 = sbr.rel (0) target = $region21
    $region20: #{deeper_gcn_forward.1} parent=1 // pred_region
      _
    $region21: #{deeper_gcn_forward.1} parent=1 // pred_fallthru
      _
    // Predicated region
    $region22: #{deeper_gcn_forward.1} parent=1 // pred_check
      _
    $region23: #{deeper_gcn_forward.1} parent=1 // pred_check_branch
      %30 = sbr.rel (0) target = $region25
    $region24: #{deeper_gcn_forward.1} parent=1 // pred_region
      _
    $region25: #{deeper_gcn_forward.1} parent=1 // pred_fallthru
      _
    // Predicated region
    $region26: #{deeper_gcn_forward.1} parent=1 // pred_check
      _
    $region27: #{deeper_gcn_forward.1} parent=1 // pred_check_branch
      %32 = sbr.rel (0) target = $region29
    $region28: #{deeper_gcn_forward.1} parent=1 // pred_region
      %34 = dma.done [#allocation3], 16
    $region29: #{deeper_gcn_forward.1} parent=1 // pred_fallthru
      _
    %35 = sfence
    %v37 = vld [vmem:[%s2] sm:$0xff]
    %v38 = vld [vmem:[%s1] sm:$0xff]
    %v39 = vld [vmem:[%s4] sm:$0xff]
    %v40 = vld [vmem:[%s4 + $0x8] sm:$0xff]
    %v41 = vld [vmem:[%s5] sm:$0x1]
    %v42 = vpack.c.bf16 %v38, %v38
    %v43 = vpack.c.bf16 %v40, %v39
    %v44 = vperm.slane %v41, 0
    %vm45 = vcmask 130048
    %v47 = vsel %vm45, %v42, 0
    %49 = vmatpush.bf16.msra.mxu0 0
    %50 = vmatpush.bf16.msra.mxu0 0
    %51 = vmatpush.bf16.msra.mxu0 0
    %52 = vmatpush.bf16.msra.mxu0 0
    %53 = vmatpush.bf16.msra.mxu0 0
    %54 = vmatpush.bf16.msra.mxu0 0
    %55 = vmatpush.bf16.msra.mxu0 0
    %56 = vmatpush.bf16.msra.mxu0 %v43
    %57 = vmatmul.bf16.gmra.mxu0 %v47
    %v58 = vpop.f32.mrf.mxu0
    %v59 = vadd.f32 %v44, %v58
    %v60 = vpop.f32.mrf.mxu0
    %61 = vdwg.mxu0
    %s62 = sld [smem:[#allocation2]]
    %v63 = vld [vmem:[%s4 + $0x10] sm:$0xff]
    %v64 = vld [vmem:[%s4 + $0x18] sm:$0xff]
    %v65 = vld [vmem:[%s4 + $0x20] sm:$0xff]
    %v66 = vld [vmem:[%s4 + $0x28] sm:$0xff]
    %v67 = vld [vmem:[%s5 + $0x5] sm:$0x1]
    %v68 = vld [vmem:[%s5 + $0x6] sm:$0x1]
    %v69 = vld [vmem:[%s5 + $0x7] sm:$0x1]
    %v70 = vld [vmem:[%s4 + $0x30] sm:$0xff]
    %v71 = vld [vmem:[%s4 + $0x38] sm:$0xff]
    %v72 = vld [vmem:[%s4 + $0x40] sm:$0xff]
    %v73 = vld [vmem:[%s4 + $0x48] sm:$0xff]
    %v74 = vld [vmem:[%s4 + $0x50] sm:$0xff]
    %v75 = vld [vmem:[%s4 + $0x58] sm:$0xff]
    %v76 = vld [vmem:[%s4 + $0x60] sm:$0xff]
    %v77 = vld [vmem:[%s4 + $0x68] sm:$0xff]
    %v78 = vld [vmem:[%s5 + $0x8] sm:$0x1]
    %v79 = vmax.f32 %v59, 0.0
    %v80 = vadd.f32 %v79, 1e-07
    %v81 = vstv %s62
    %v82 = vmul.f32 %v81, %v80
    %vm83 = vcmask 261120
    %v84 = vsel %vm83, %v82, -inf
    %v85 = vrot.slane %v84, 4
    %v86 = vmax.f32 %v84, %v85
    %v87 = vrot.slane %v86, 2
    %v88 = vmax.f32 %v86, %v87
    %v89 = vrot.slane %v88, 1
    %v90 = vmax.f32 %v88, %v89
    %v91 = vsub.f32 %v82, %v90
    %v92 = vmul.f32 %v91, 1.442695
    %v93 = vpow.pop %v92
    %v94 = vmul.f32 %v93, %v80
    %96 = vrot.lane.b32.xlu0 %v94, 32
    %v97 = vpop.permute.xlu0 %96
    %v99 = vsel %vm83, %v93, %v97
    %vm100 = vcmask 64512
    %v102 = vsel %vm100, %v37, 0
    %104 = vmatpush.msra.mxu0 0.0
    %105 = vmatpush.msra.mxu0 0.0
    %106 = vmatpush.msra.mxu0 0.0
    %107 = vmatpush.msra.mxu0 0.0
    %108 = vmatpush.msra.mxu0 0.0
    %109 = vmatpush.msra.mxu0 0.0
    %110 = vmatpush.msra.mxu0 0.0
    %111 = vmatpush.msra.mxu0 0.0
    %112 = vmatpush.msra.mxu0 0.0
    %113 = vmatpush.msra.mxu0 0.0
    %114 = vmatpush.msra.mxu0 0.0
    %115 = vmatpush.msra.mxu0 0.0
    %116 = vmatpush.msra.mxu0 0.0
    %117 = vmatpush.msra.mxu0 0.0
    %118 = vmatpush.msra.mxu0 0.0
    %119 = vmatpush.msra.mxu0 %v99
    %120 = vmatmul.f32.gmra.mxu0 %v102
    %v121 = vpop.f32.mrf.mxu0
    %v122 = vadd.f32 0.0, %v121
    %123 = vdwg.mxu0
    %vm124 = vcmp.gt.f32.partialorder %v122, 0.0
    %v125 = vsel %vm124, %v122, 1.0
    %v126 = vrcp.pop %v125
    %128 = vrot.lane.b32.xlu0 %v126, 32
    %v129 = vpop.permute.xlu0 %128
    %v131 = vmul.f32 %v122, %v129
    %133 = vrot.lane.b32.xlu0 %v131, 96
    %v134 = vpop.permute.xlu0 %133
    %v136 = vsel %vm124, %v134, 0.0
    %v137 = vadd.f32 %v136, %v59
    %v138 = vpack.c.bf16 %v137, %v137
    %v139 = vpack.c.bf16 %v64, %v63
    %v140 = vpack.c.bf16 %v66, %v65
    %v141 = vperm.slane %v67, 0
    %v143 = vsel %vm83, %v138, 0
    %145 = vmatpush.bf16.msra.mxu0 0
    %146 = vmatpush.bf16.msra.mxu0 0
    %147 = vmatpush.bf16.msra.mxu0 0
    %148 = vmatpush.bf16.msra.mxu0 0
    %149 = vmatpush.bf16.msra.mxu0 0
    %150 = vmatpush.bf16.msra.mxu0 0
    %151 = vmatpush.bf16.msra.mxu0 %v140
    %152 = vmatpush.bf16.msra.mxu0 %v139
    %153 = vmatmul.bf16.gmra.mxu0 %v143
    %v154 = vpop.f32.mrf.mxu0
    %v155 = vadd.f32 %v141, %v154
    %v156 = vpop.f32.mrf.mxu0
    %157 = vdwg.mxu0
    %vm158 = vcmask 523264
    %v159 = vsel %vm158, %v155, 0.0
    %160 = vadd.xlane.f32.xlu0 %v159
    %v161 = vpop.xlane.xlu0 %160
    %v162 = vrcp.pop 64.0
    %v163 = vmul.f32 64.0, %v162
    %v164 = vsub.f32 1.0, %v163
    %v165 = vmul.f32 %v162, %v164
    %v166 = vadd.f32 %v162, %v165
    %vm167 = vweird.f32 %v162
    %v168 = vsel %vm167, %v162, %v166
    %v169 = vmul.f32 %v161, %v168
    %v170 = vsub.f32 %v155, %v169
    %v171 = vmul.f32 %v170, %v170
    %v172 = vsel %vm158, %v171, 0.0
    %173 = vadd.xlane.f32.xlu0 %v172
    %v174 = vpop.xlane.xlu0 %173
    %v175 = vmul.f32 %v174, %v168
    %v176 = vadd.f32 %v175, 1e-05
    %v177 = vrsqrt.pop %v176
    %v178 = vmul.f32 %v177, %v176
    %v179 = vmul.f32 %v178, %v177
    %v180 = vmul.f32 0.5, %v179
    %v181 = vsub.f32 1.5, %v180
    %v182 = vmul.f32 %v177, %v181
    %vm183 = vweird.f32 %v176
    %vm184 = vweird.f32 %v177
    %vm185 = vmor %vm183, %vm184
    %v186 = vsel %vm185, %v177, %v182
    %v187 = vmul.f32 %v170, %v186
    %v188 = vperm.slane %v68, 0
    %v189 = vmul.f32 %v187, %v188
    %v190 = vperm.slane %v69, 0
    %v191 = vadd.f32 %v189, %v190
    %v192 = vmax.f32 %v191, 0.0
    %v193 = vpack.c.bf16 %v192, %v192
    %v194 = vpack.c.bf16 %v71, %v70
    %v195 = vpack.c.bf16 %v73, %v72
    %v196 = vpack.c.bf16 %v75, %v74
    %v197 = vpack.c.bf16 %v77, %v76
    %v198 = vperm.slane %v78, 0
    %v200 = vsel %vm158, %v193, 0
    %202 = vmatpush.bf16.msra.mxu0 0
    %203 = vmatpush.bf16.msra.mxu0 0
    %204 = vmatpush.bf16.msra.mxu0 0
    %205 = vmatpush.bf16.msra.mxu0 0
    %206 = vmatpush.bf16.msra.mxu0 %v197
    %207 = vmatpush.bf16.msra.mxu0 %v196
    %208 = vmatpush.bf16.msra.mxu0 %v195
    %209 = vmatpush.bf16.msra.mxu0 %v194
    %210 = vmatmul.bf16.gmra.mxu0 %v200
    %v211 = vpop.f32.mrf.mxu0
    %v212 = vadd.f32 %v198, %v211
    %v213 = vpop.f32.mrf.mxu0
    %214 = vdwg.mxu0
    %v215 = vld [vmem:[%s5 + $0x9] sm:$0x1]
    %v216 = vld [vmem:[%s5 + $0xa] sm:$0x1]
    %v217 = vsel %vm83, %v212, 0.0
    %218 = vadd.xlane.f32.xlu0 %v217
    %v219 = vpop.xlane.xlu0 %218
    %v220 = vrcp.pop 32.0
    %v221 = vmul.f32 32.0, %v220
    %v222 = vsub.f32 1.0, %v221
    %v223 = vmul.f32 %v220, %v222
    %v224 = vadd.f32 %v220, %v223
    %vm225 = vweird.f32 %v220
    %v226 = vsel %vm225, %v220, %v224
    %v227 = vmul.f32 %v219, %v226
    %v228 = vsub.f32 %v212, %v227
    %v229 = vmul.f32 %v228, %v228
    %v230 = vsel %vm83, %v229, 0.0
    %231 = vadd.xlane.f32.xlu0 %v230
    %v232 = vpop.xlane.xlu0 %231
    %v233 = vmul.f32 %v232, %v226
    %v234 = vadd.f32 %v233, 1e-05
    %v235 = vrsqrt.pop %v234
    %v236 = vmul.f32 %v235, %v234
    %v237 = vmul.f32 %v236, %v235
    %v238 = vmul.f32 0.5, %v237
    %v239 = vsub.f32 1.5, %v238
    %v240 = vmul.f32 %v235, %v239
    %vm241 = vweird.f32 %v234
    %vm242 = vweird.f32 %v235
    %vm243 = vmor %vm241, %vm242
    %v244 = vsel %vm243, %v235, %v240
    %v245 = vmul.f32 %v228, %v244
    %v246 = vperm.slane %v215, 0
    %v247 = vmul.f32 %v245, %v246
    %v248 = vperm.slane %v216, 0
    %v249 = vadd.f32 %v247, %v248
    %v250 = vmax.f32 %v249, 0.0
    %s251 = sld [smem:[#allocation2 + $0x1]]
    %v252 = vld [vmem:[%s4 + $0x70] sm:$0xff]
    %v253 = vld [vmem:[%s4 + $0x78] sm:$0xff]
    %v254 = vld [vmem:[%s4 + $0x80] sm:$0xff]
    %v255 = vld [vmem:[%s4 + $0x88] sm:$0xff]
    %v256 = vld [vmem:[%s5 + $0xb] sm:$0x1]
    %v257 = vld [vmem:[%s5 + $0xc] sm:$0x1]
    %v258 = vld [vmem:[%s5 + $0xd] sm:$0x1]
    %v259 = vld [vmem:[%s4 + $0x90] sm:$0xff]
    %v260 = vld [vmem:[%s4 + $0x98] sm:$0xff]
    %v261 = vld [vmem:[%s4 + $0xa0] sm:$0xff]
    %v262 = vld [vmem:[%s4 + $0xa8] sm:$0xff]
    %v263 = vld [vmem:[%s4 + $0xb0] sm:$0xff]
    %v264 = vld [vmem:[%s4 + $0xb8] sm:$0xff]
    %v265 = vld [vmem:[%s4 + $0xc0] sm:$0xff]
    %v266 = vld [vmem:[%s4 + $0xc8] sm:$0xff]
    %v267 = vld [vmem:[%s5 + $0xe] sm:$0x1]
    %v268 = vmax.f32 %v250, 0.0
    %v269 = vadd.f32 %v268, 1e-07
    %v270 = vstv %s251
    %v271 = vmul.f32 %v270, %v269
    %v272 = vsel %vm83, %v271, -inf
    %v273 = vrot.slane %v272, 4
    %v274 = vmax.f32 %v272, %v273
    %v275 = vrot.slane %v274, 2
    %v276 = vmax.f32 %v274, %v275
    %v277 = vrot.slane %v276, 1
    %v278 = vmax.f32 %v276, %v277
    %v279 = vsub.f32 %v271, %v278
    %v280 = vmul.f32 %v279, 1.442695
    %v281 = vpow.pop %v280
    %v282 = vmul.f32 %v281, %v269
    %284 = vrot.lane.b32.xlu0 %v282, 32
    %v285 = vpop.permute.xlu0 %284
    %v287 = vsel %vm83, %v281, %v285
    %288 = vmatpush.msra.mxu0 0.0
    %289 = vmatpush.msra.mxu0 0.0
    %290 = vmatpush.msra.mxu0 0.0
    %291 = vmatpush.msra.mxu0 0.0
    %292 = vmatpush.msra.mxu0 0.0
    %293 = vmatpush.msra.mxu0 0.0
    %294 = vmatpush.msra.mxu0 0.0
    %295 = vmatpush.msra.mxu0 0.0
    %296 = vmatpush.msra.mxu0 0.0
    %297 = vmatpush.msra.mxu0 0.0
    %298 = vmatpush.msra.mxu0 0.0
    %299 = vmatpush.msra.mxu0 0.0
    %300 = vmatpush.msra.mxu0 0.0
    %301 = vmatpush.msra.mxu0 0.0
    %302 = vmatpush.msra.mxu0 0.0
    %303 = vmatpush.msra.mxu0 %v287
    %304 = vmatmul.f32.gmra.mxu0 %v102
    %v305 = vpop.f32.mrf.mxu0
    %v306 = vadd.f32 0.0, %v305
    %307 = vdwg.mxu0
    %vm308 = vcmp.gt.f32.partialorder %v306, 0.0
    %v309 = vsel %vm308, %v306, 1.0
    %v310 = vrcp.pop %v309
    %312 = vrot.lane.b32.xlu0 %v310, 32
    %v313 = vpop.permute.xlu0 %312
    %v315 = vmul.f32 %v306, %v313
    %317 = vrot.lane.b32.xlu0 %v315, 96
    %v318 = vpop.permute.xlu0 %317
    %v320 = vsel %vm308, %v318, 0.0
    %v321 = vadd.f32 %v320, %v250
    %v322 = vpack.c.bf16 %v321, %v321
    %v323 = vpack.c.bf16 %v253, %v252
    %v324 = vpack.c.bf16 %v255, %v254
    %v325 = vperm.slane %v256, 0
    %v327 = vsel %vm83, %v322, 0
    %329 = vmatpush.bf16.msra.mxu0 0
    %330 = vmatpush.bf16.msra.mxu0 0
    %331 = vmatpush.bf16.msra.mxu0 0
    %332 = vmatpush.bf16.msra.mxu0 0
    %333 = vmatpush.bf16.msra.mxu0 0
    %334 = vmatpush.bf16.msra.mxu0 0
    %335 = vmatpush.bf16.msra.mxu0 %v324
    %336 = vmatpush.bf16.msra.mxu0 %v323
    %337 = vmatmul.bf16.gmra.mxu0 %v327
    %v338 = vpop.f32.mrf.mxu0
    %v339 = vadd.f32 %v325, %v338
    %v340 = vpop.f32.mrf.mxu0
    %341 = vdwg.mxu0
    %v342 = vsel %vm158, %v339, 0.0
    %343 = vadd.xlane.f32.xlu0 %v342
    %v344 = vpop.xlane.xlu0 %343
    %v345 = vmul.f32 %v344, %v168
    %v346 = vsub.f32 %v339, %v345
    %v347 = vmul.f32 %v346, %v346
    %v348 = vsel %vm158, %v347, 0.0
    %349 = vadd.xlane.f32.xlu0 %v348
    %v350 = vpop.xlane.xlu0 %349
    %v351 = vmul.f32 %v350, %v168
    %v352 = vadd.f32 %v351, 1e-05
    %v353 = vrsqrt.pop %v352
    %v354 = vmul.f32 %v353, %v352
    %v355 = vmul.f32 %v354, %v353
    %v356 = vmul.f32 0.5, %v355
    %v357 = vsub.f32 1.5, %v356
    %v358 = vmul.f32 %v353, %v357
    %vm359 = vweird.f32 %v352
    %vm360 = vweird.f32 %v353
    %vm361 = vmor %vm359, %vm360
    %v362 = vsel %vm361, %v353, %v358
    %v363 = vmul.f32 %v346, %v362
    %v364 = vperm.slane %v257, 0
    %v365 = vmul.f32 %v363, %v364
    %v366 = vperm.slane %v258, 0
    %v367 = vadd.f32 %v365, %v366
    %v368 = vmax.f32 %v367, 0.0
    %v369 = vpack.c.bf16 %v368, %v368
    %v370 = vpack.c.bf16 %v260, %v259
    %v371 = vpack.c.bf16 %v262, %v261
    %v372 = vpack.c.bf16 %v264, %v263
    %v373 = vpack.c.bf16 %v266, %v265
    %v374 = vperm.slane %v267, 0
    %v376 = vsel %vm158, %v369, 0
    %378 = vmatpush.bf16.msra.mxu0 0
    %379 = vmatpush.bf16.msra.mxu0 0
    %380 = vmatpush.bf16.msra.mxu0 0
    %381 = vmatpush.bf16.msra.mxu0 0
    %382 = vmatpush.bf16.msra.mxu0 %v373
    %383 = vmatpush.bf16.msra.mxu0 %v372
    %384 = vmatpush.bf16.msra.mxu0 %v371
    %385 = vmatpush.bf16.msra.mxu0 %v370
    %386 = vmatmul.bf16.gmra.mxu0 %v376
    %v387 = vpop.f32.mrf.mxu0
    %v388 = vadd.f32 %v374, %v387
    %v389 = vpop.f32.mrf.mxu0
    %390 = vdwg.mxu0
    %v391 = vadd.f32 %v212, %v388
    %v392 = vld [vmem:[%s5 + $0x3] sm:$0x1]
    %v393 = vld [vmem:[%s5 + $0x4] sm:$0x1]
    %v394 = vsel %vm83, %v391, 0.0
    %395 = vadd.xlane.f32.xlu0 %v394
    %v396 = vpop.xlane.xlu0 %395
    %v397 = vmul.f32 %v396, %v226
    %v398 = vsub.f32 %v391, %v397
    %v399 = vmul.f32 %v398, %v398
    %v400 = vsel %vm83, %v399, 0.0
    %401 = vadd.xlane.f32.xlu0 %v400
    %v402 = vpop.xlane.xlu0 %401
    %v403 = vmul.f32 %v402, %v226
    %v404 = vadd.f32 %v403, 1e-05
    %v405 = vrsqrt.pop %v404
    %v406 = vmul.f32 %v405, %v404
    %v407 = vmul.f32 %v406, %v405
    %v408 = vmul.f32 0.5, %v407
    %v409 = vsub.f32 1.5, %v408
    %v410 = vmul.f32 %v405, %v409
    %vm411 = vweird.f32 %v404
    %vm412 = vweird.f32 %v405
    %vm413 = vmor %vm411, %vm412
    %v414 = vsel %vm413, %v405, %v410
    %v415 = vmul.f32 %v398, %v414
    %v416 = vperm.slane %v392, 0
    %v417 = vmul.f32 %v415, %v416
    %v418 = vperm.slane %v393, 0
    %v419 = vadd.f32 %v417, %v418
    %v420 = vmax.f32 %v419, 0.0
    %v421 = vld [vmem:[%s3] sm:$0xff]
    %v423 = vsel %vm100, %v421, 0
    %425 = vmatpush.msra.mxu0 0.0
    %426 = vmatpush.msra.mxu0 0.0
    %427 = vmatpush.msra.mxu0 0.0
    %428 = vmatpush.msra.mxu0 0.0
    %429 = vmatpush.msra.mxu0 0.0
    %430 = vmatpush.msra.mxu0 0.0
    %431 = vmatpush.msra.mxu0 0.0
    %432 = vmatpush.msra.mxu0 0.0
    %433 = vmatpush.msra.mxu0 0.0
    %434 = vmatpush.msra.mxu0 0.0
    %435 = vmatpush.msra.mxu0 0.0
    %436 = vmatpush.msra.mxu0 0.0
    %437 = vmatpush.msra.mxu0 0.0
    %438 = vmatpush.msra.mxu0 0.0
    %439 = vmatpush.msra.mxu0 0.0
    %440 = vmatpush.msra.mxu0 %v420
    %441 = vmatmul.f32.gmra.mxu0 %v423
    %v442 = vpop.f32.mrf.mxu0
    %v443 = vadd.f32 0.0, %v442
    %444 = vdwg.mxu0
    %v445 = vld [vmem:[%s4 + $0xd0] sm:$0xff]
    %v446 = vld [vmem:[%s4 + $0xd8] sm:$0xff]
    %v447 = vld [vmem:[%s4 + $0xe0] sm:$0xff]
    %v448 = vld [vmem:[%s4 + $0xe8] sm:$0xff]
    %v449 = vld [vmem:[%s5 + $0x1] sm:$0x1]
    %v450 = vpack.c.bf16 %v443, %v443
    %v451 = vpack.c.bf16 %v446, %v445
    %v452 = vpack.c.bf16 %v448, %v447
    %v453 = vperm.slane %v449, 0
    %v455 = vsel %vm83, %v450, 0
    %457 = vmatpush.bf16.msra.mxu0 0
    %458 = vmatpush.bf16.msra.mxu0 0
    %459 = vmatpush.bf16.msra.mxu0 0
    %460 = vmatpush.bf16.msra.mxu0 0
    %461 = vmatpush.bf16.msra.mxu0 0
    %462 = vmatpush.bf16.msra.mxu0 0
    %463 = vmatpush.bf16.msra.mxu0 %v452
    %464 = vmatpush.bf16.msra.mxu0 %v451
    %465 = vmatmul.bf16.gmra.mxu0 %v455
    %v466 = vpop.f32.mrf.mxu0
    %v467 = vadd.f32 %v453, %v466
    %v468 = vpop.f32.mrf.mxu0
    %469 = vdwg.mxu0
    %v470 = vmax.f32 %v467, 0.0
    %v471 = vld [vmem:[%s4 + $0xf0] sm:$0xff]
    %v472 = vld [vmem:[%s4 + $0xf8] sm:$0xff]
    %v473 = vld [vmem:[%s5 + $0x2] sm:$0x1]
    %v474 = vpack.c.bf16 %v470, %v470
    %v475 = vpack.c.bf16 %v472, %v471
    %v476 = vperm.slane %v473, 0
    %v478 = vsel %vm45, %v474, 0
    %480 = vmatpush.bf16.msra.mxu0 0
    %481 = vmatpush.bf16.msra.mxu0 0
    %482 = vmatpush.bf16.msra.mxu0 0
    %483 = vmatpush.bf16.msra.mxu0 0
    %484 = vmatpush.bf16.msra.mxu0 0
    %485 = vmatpush.bf16.msra.mxu0 0
    %486 = vmatpush.bf16.msra.mxu0 0
    %487 = vmatpush.bf16.msra.mxu0 %v475
    %488 = vmatmul.bf16.gmra.mxu0 %v478
    %v489 = vpop.f32.mrf.mxu0
    %v490 = vadd.f32 %v476, %v489
    %v491 = vpop.f32.mrf.mxu0
    %492 = vdwg.mxu0
    %493 = vst [vmem:[%s6] sm:$0xff] %v490
    // Predicated region
    $region30: #{deeper_gcn_forward.1} parent=1 // pred_check
      _
    $region31: #{deeper_gcn_forward.1} parent=1 // pred_check_branch
      %495 = sbr.rel (0) target = $region33
    $region32: #{deeper_gcn_forward.1} parent=1 // pred_region
      _
    $region33: #{deeper_gcn_forward.1} parent=1 // pred_fallthru
      _
    // Predicated region
    $region34: #{deeper_gcn_forward.1} parent=1 // pred_check
      _
    $region35: #{deeper_gcn_forward.1} parent=1 // pred_check_branch
      %497 = sbr.rel (0) target = $region37
    $region36: #{deeper_gcn_forward.1} parent=1 // pred_region
      _
    $region37: #{deeper_gcn_forward.1} parent=1 // pred_fallthru
      _
    %498 = vsyncpa [#allocation3], 1

</llo_original>
